<compile_context>
chip_gen: v7x
topology: tpu7x:2x2x1
jax: 0.10.0
libtpu: 0.0.40
codegen_flags: <defaults>
</compile_context>

<pallas_src>
import functools

import jax
import jax.numpy as jnp
import numpy as np
from jax.experimental import pallas as pl
from jax.experimental.pallas import tpu as pltpu

_SMALL_CHANNEL_LIMIT = 32   # fold W into the lane axis when C is this small


# ---------------------------------------------------------------------------
# Chip-aware block-sizing / VMEM policy
# ---------------------------------------------------------------------------
@functools.lru_cache(maxsize=None)
def _chip_config():
  """Returns (num_tensorcores, per-block byte budget, scoped VMEM limit | None)."""
  kind = ""
  try:
    kind = jax.devices()[0].device_kind.lower()
  except Exception:   # best-effort query only; fall through to safe defaults
    pass
  if "v7" in kind:
    # v7x: 2 TCs but only 64 MiB VMEM (32 MiB scoped default) -> modest blocks,
    # keep >= 2 grid steps, do not raise the scoped limit.
    return 2, 7 << 20, None
  if "v4" in kind or "v5p" in kind:
    # Megacore chips: 2 cores, 128 MiB VMEM.
    return 2, 14 << 20, 64 << 20
  # v5e / v6e: single TensorCore, 128 MiB physical VMEM -> large blocks are the
  # #1 lever (HBM-bound op); raise the scoped limit so the pipeline can use them.
  return 1, 14 << 20, 64 << 20


# ---------------------------------------------------------------------------
# Kernels
# ---------------------------------------------------------------------------
def _folded_resblock_kernel(x_ref, w1_ref, b1_ref, w2t_ref, w2b_ref, b2_ref,
                            w3_ref, b3_ref, o_ref, *, H, mxu_dtype):
  """Lane-dense small-C kernel. x_ref: (NB, H, W*C); weights pre-packed."""
  NB, _, WC = x_ref.shape
  R = NB * H

  # (NB, H, W*C) -> (NB*H, W*C): merges leading dims only (no relayout).
  x = x_ref[...].astype(jnp.float32).reshape(R, WC)

  # 1x1 conv (C -> C//2) + ReLU via block-diagonal weights; stays lane-dense.
  # bf16 MXU operands, f32 accumulate / bias / ReLU / residual.
  h1 = jnp.dot(x.astype(mxu_dtype), w1_ref[...],
               preferred_element_type=jnp.float32)
  h1 = jnp.maximum(h1 + b1_ref[...], 0.0)                        # (R, W*C2)

  # Masked 3x3 conv: horizontal taps + mask live inside the banded weights;
  # the ky=0 taps only need image row y-1 = one sublane roll, zeroed at y == 0
  # (which also kills wrap-around across images / array ends).
  y_in_img = jax.lax.broadcasted_iota(jnp.int32, (R, 1), 0) % H
  up = jnp.where(y_in_img > 0, pltpu.roll(h1, 1, axis=0), 0.0)   # row y-1
  acc = jnp.dot(up.astype(mxu_dtype), w2t_ref[...],
                preferred_element_type=jnp.float32)
  acc = acc + jnp.dot(h1.astype(mxu_dtype), w2b_ref[...],
                      preferred_element_type=jnp.float32)
  h2 = jnp.maximum(acc + b2_ref[...], 0.0)                       # (R, W*C2)

  # 1x1 conv (C//2 -> C) + ReLU.
  h3 = jnp.dot(h2.astype(mxu_dtype), w3_ref[...],
               preferred_element_type=jnp.float32)
  h3 = jnp.maximum(h3 + b3_ref[...], 0.0)                        # (R, W*C)

  # Residual; store is lane-dense (last dim = W*C, 128 in the demo).
  o_ref[...] = (x + h3).reshape(NB, H, WC).astype(o_ref.dtype)


def _wide_resblock_kernel(x_ref, w1_ref, b1_ref, w2_ref, b2_ref, w3_ref,
                          b3_ref, o_ref, *, H, W, mxu_dtype):
  """Channels-on-lanes kernel for realistic C. x_ref: (NB, H*W, C)."""
  NB, _, C = x_ref.shape
  M = NB * H * W

  x = x_ref[...].astype(jnp.float32).reshape(M, C)   # leading-dim merge only

  h1 = jnp.dot(x.astype(mxu_dtype), w1_ref[...],
               preferred_element_type=jnp.float32)
  h1 = jnp.maximum(h1 + b1_ref[...], 0.0)            # (M, C2), f32

  # Unmasked taps (dy, dx) of the type-B mask as sublane rolls of h1 along the
  # flattened (n, y, x) axis + boundary masks.  Each tap contracts against its
  # own (C2, C2) slab of w2_ref and sums into a single f32 accumulator -- no
  # (M, 5*C2) concatenate is materialized.  Taps stay f32 (safe for v5e's
  # f32-only VPU); they are cast to bf16 only at the MXU operand.
  idx = jax.lax.broadcasted_iota(jnp.int32, (M, 1), 0)
  col = idx % W
  row = (idx // W) % H
  not_top = row > 0
  not_left = col > 0
  not_right = col < (W - 1)

  # Center tap (dy, dx) = (0, 0) is slot 4 of the packed weight.
  acc = jnp.dot(h1.astype(mxu_dtype), w2_ref[4],
                preferred_element_type=jnp.float32)
  for slot, shift, valid in (
      (0, W + 1, jnp.logical_and(not_top, not_left)),   # (dy, dx) = (-1, -1)
      (1, W,     not_top),                              # (-1,  0)
      (2, W - 1, jnp.logical_and(not_top, not_right)),  # (-1, +1)
      (3, 1,     not_left),                             # ( 0, -1)
  ):
    tap = jnp.where(valid, pltpu.roll(h1, shift, axis=0), 0.0)
    acc = acc + jnp.dot(tap.astype(mxu_dtype), w2_ref[slot],
                        preferred_element_type=jnp.float32)
  h2 = jnp.maximum(acc + b2_ref[...], 0.0)             # (M, C2)

  h3 = jnp.dot(h2.astype(mxu_dtype), w3_ref[...],
               preferred_element_type=jnp.float32)
  h3 = jnp.maximum(h3 + b3_ref[...], 0.0)              # (M, C)

  o_ref[...] = (x + h3).reshape(NB, H * W, C).astype(o_ref.dtype)


# ---------------------------------------------------------------------------
# Wrapper-side weight packing (applied once, outside the hot loop)
# ---------------------------------------------------------------------------
def _block_diag(w, W):
  """(Cin, Cout) 1x1-conv weight -> (W*Cin, W*Cout) block-diagonal matrix."""
  cin, cout = w.shape
  eye = jnp.eye(W, dtype=w.dtype)
  return (eye[:, None, :, None] * w[None, :, None, :]).reshape(W * cin, W * cout)


def _banded(w_kx, W, dxs):
  """(3, Cin, Cout) one-kernel-row weights -> (W*Cin, W*Cout) banded matrix.

  Entry [x_s*Cin + c, x_o*Cout + e] = w_kx[dx + 1, c, e] with dx = x_s - x_o
  for dx in `dxs`; everything else is zero.  Taps reaching outside the image
  are simply absent (== the conv's zero padding), and taps not listed in `dxs`
  are dropped (== the autoregressive mask).
  """
  cin, cout = w_kx.shape[1:]
  xs = jnp.arange(W)
  diff = xs[:, None] - xs[None, :]                     # x_s - x_o
  out = jnp.zeros((W, cin, W, cout), w_kx.dtype)
  for dx in dxs:
    sel = (diff == dx).astype(w_kx.dtype)
    out = out + sel[:, None, :, None] * w_kx[dx + 1][None, :, None, :]
  return out.reshape(W * cin, W * cout)


def _pack_folded(params, W, mxu_dtype):
  w1, b1, w2, b2, w3, b3 = params
  tile = lambda b: jnp.tile(jnp.reshape(b, (-1,)), W).reshape(1, -1).astype(
      jnp.float32)
  w1b = _block_diag(w1, W).astype(mxu_dtype)             # (W*C,  W*C2)
  w2t = _banded(w2[0], W, (-1, 0, 1)).astype(mxu_dtype)  # ky=0 -> image row y-1
  w2b = _banded(w2[1], W, (-1, 0)).astype(mxu_dtype)     # ky=1, unmasked taps
  w3b = _block_diag(w3, W).astype(mxu_dtype)             # (W*C2, W*C)
  return w1b, tile(b1), w2t, w2b, tile(b2), w3b, tile(b3)


def _pack_wide(params, mxu_dtype):
  w1, b1, w2, b2, w3, b3 = params
  # Stack the 5 unmasked taps (ky,kx) = (0,0),(0,1),(0,2),(1,0),(1,1) along a
  # leading axis (slot 4 = center tap); masked taps are never shipped.
  w2p = jnp.stack([w2[0, 0], w2[0, 1], w2[0, 2], w2[1, 0], w2[1, 1]],
                  axis=0).astype(mxu_dtype)              # (5, C2, C2)
  row = lambda b: jnp.reshape(b, (1, -1)).astype(jnp.float32)
  return (w1.astype(mxu_dtype), row(b1), w2p, row(b2),
          w3.astype(mxu_dtype), row(b3))


# ---------------------------------------------------------------------------
# pallas_call wrappers
# ---------------------------------------------------------------------------
def _choose_batch_block(N, per_image_bytes, *, budget_bytes, num_tc):
  """Images per grid step: big enough to amortize the ~0.35 us per-step
  pipeline overhead, small enough for VMEM; only on multi-TensorCore chips do
  we force >= num_tc grid steps so every core gets work."""
  nb = int(max(1, min(N, budget_bytes // max(per_image_bytes, 1))))
  if num_tc >= 2 and N >= num_tc:
    nb = max(1, min(nb, N // num_tc))
  while N % nb:                     # keep blocks uniform (divisor of N)
    nb -= 1
  return nb


def _full_spec(a):
  nd = a.ndim
  return pl.BlockSpec(a.shape, lambda i, _nd=nd: (0,) * _nd)


def _compiler_params(vmem_limit):
  kw = dict(dimension_semantics=("parallel",))
  if vmem_limit is not None:
    kw["vmem_limit_bytes"] = int(vmem_limit)
  return pltpu.CompilerParams(**kw)


def _weight_bytes(packed):
  return sum(int(np.prod(p.shape)) * p.dtype.itemsize for p in packed)


def _masked_residual_block_folded(x_nhwc, params, mxu_dtype=jnp.bfloat16):
  N, H, W, C = x_nhwc.shape
  C2 = params[0].shape[1]
  num_tc, budget, vmem_limit = _chip_config()
  packed = _pack_folded(params, W, mxu_dtype)

  # TODO(synk): if W*C is not a multiple of 128, pad the lane (width) axis of
  # x2 and the packed weights to keep stores unmasked; the demo hits 128.
  x2 = x_nhwc.reshape(N, H, W * C)               # contiguous merge: free
  bx = x_nhwc.dtype.itemsize
  # Per-image VMEM: double-buffered IO + f32 x/h3/out + h1/up/acc/h2 + bf16 casts.
  per_image = H * W * (4 * bx * C + 4 * (6 * C + 6 * C2))
  nb = _choose_batch_block(N, per_image, budget_bytes=budget, num_tc=num_tc)

  wc, wc2 = W * C, W * C2
  cost = pl.CostEstimate(
      flops=int(N * H * (4 * wc * wc2 + 4 * wc2 * wc2)),
      transcendentals=0,
      bytes_accessed=int(2 * N * H * wc * bx + _weight_bytes(packed)))

  io_spec = pl.BlockSpec((nb, H, W * C), lambda i: (i, 0, 0))
  kernel = functools.partial(_folded_resblock_kernel, H=H, mxu_dtype=mxu_dtype)
  y2 = pl.pallas_call(
      kernel,
      out_shape=jax.ShapeDtypeStruct((N, H, W * C), x_nhwc.dtype),
      grid_spec=pltpu.PrefetchScalarGridSpec(
          num_scalar_prefetch=0,
          grid=(N // nb,),
          in_specs=[io_spec] + [_full_spec(p) for p in packed],
          out_specs=io_spec,
      ),
      compiler_params=_compiler_params(vmem_limit),
      cost_estimate=cost,
  )(x2, *packed)
  return y2.reshape(N, H, W, C)


def _masked_residual_block_wide(x_nhwc, params, mxu_dtype=jnp.bfloat16):
  N, H, W, C = x_nhwc.shape
  C2 = params[0].shape[1]
  num_tc, budget, vmem_limit = _chip_config()
  packed = _pack_wide(params, mxu_dtype)

  # TODO(synk): for very large H*W*C images (where even nb=1 exceeds the
  # budget, esp. v7x's 64 MiB VMEM), add a second grid axis tiling H with a
  # 1-row halo for the dy=-1 taps.
  x2 = x_nhwc.reshape(N, H * W, C)               # contiguous merge: free
  bx = x_nhwc.dtype.itemsize
  # Per-image VMEM: double-buffered IO + f32 x/h3/out + h1/tap/acc/h2 + bf16 casts.
  per_image = H * W * (4 * bx * C + 4 * (3 * C + 8 * C2))
  nb = _choose_batch_block(N, per_image, budget_bytes=budget, num_tc=num_tc)

  cost = pl.CostEstimate(
      flops=int(N * H * W * (4 * C * C2 + 10 * C2 * C2)),
      transcendentals=0,
      bytes_accessed=int(2 * N * H * W * C * bx + _weight_bytes(packed)))

  io_spec = pl.BlockSpec((nb, H * W, C), lambda i: (i, 0, 0))
  kernel = functools.partial(_wide_resblock_kernel, H=H, W=W,
                             mxu_dtype=mxu_dtype)
  y2 = pl.pallas_call(
      kernel,
      out_shape=jax.ShapeDtypeStruct((N, H * W, C), x_nhwc.dtype),
      grid_spec=pltpu.PrefetchScalarGridSpec(
          num_scalar_prefetch=0,
          grid=(N // nb,),
          in_specs=[io_spec] + [_full_spec(p) for p in packed],
          out_specs=io_spec,
      ),
      compiler_params=_compiler_params(vmem_limit),
      cost_estimate=cost,
  )(x2, *packed)
  return y2.reshape(N, H, W, C)


def masked_residual_block_nhwc(x_nhwc, params):
  """Preferred (layout-stable) entry point: x is NHWC, output is NHWC."""
  C = x_nhwc.shape[-1]
  if C <= _SMALL_CHANNEL_LIMIT:
    return _masked_residual_block_folded(x_nhwc, params)
  return _masked_residual_block_wide(x_nhwc, params)


def masked_residual_block(x_nchw, params):
  """PyTorch-convention entry point (NCHW).  For whole networks, hoist these
  transposes out and chain masked_residual_block_nhwc calls instead — the op
  is HBM-bound and the two transposes roughly triple HBM traffic."""
  x_nhwc = jnp.transpose(x_nchw, (0, 2, 3, 1))
  y_nhwc = masked_residual_block_nhwc(x_nhwc, params)
  return jnp.transpose(y_nhwc, (0, 3, 1, 2))


# ---------------------------------------------------------------------------
# Parameters / reference
# ---------------------------------------------------------------------------
def init_params(key, n_channels):
  """Deterministic synthetic parameters (shapes match the nn.Module)."""
  c, c2 = n_channels, n_channels // 2
  k1, k2, k3, k4, k5, k6 = jax.random.split(key, 6)

  def u(k, shape, fan_in):
    bound = 1.0 / np.sqrt(fan_in)
    return jax.random.uniform(k, shape, jnp.float32, -bound, bound)

  w1 = u(k1, (c, c2), c)                 # 1x1 conv: (Cin, Cout)
  b1 = u(k2, (1, c2), c)
  w2 = u(k3, (3, 3, c2, c2), 9 * c2)     # HWIO
  b2 = u(k4, (1, c2), 9 * c2)
  w3 = u(k5, (c2, c), c2)
  b3 = u(k6, (1, c), c2)

  # Type-B (non-causal) autoregressive mask, as MaskedConv2d applies at forward.
  mask = np.zeros((3, 3), np.float32)
  mask[0, :] = 1.0
  mask[1, :2] = 1.0
  w2 = w2 * jnp.asarray(mask)[:, :, None, None]

  return (w1, b1, w2, b2, w3, b3)


def reference_nhwc(x_nhwc, params):
  """Pure-JAX reference of the PyTorch forward, NHWC layout."""
  w1, b1, w2, b2, w3, b3 = params
  h = jax.nn.relu(jnp.einsum('nhwc,cd->nhwd', x_nhwc, w1) + b1[0])
  h = jax.lax.conv_general_dilated(
      h, w2, window_strides=(1, 1), padding='SAME',
      dimension_numbers=('NHWC', 'HWIO', 'NHWC'))
  h = jax.nn.relu(h + b2[0])
  h = jax.nn.relu(jnp.einsum('nhwc,cd->nhwd', h, w3) + b3[0])
  return x_nhwc + h


if __name__ == "__main__":
  key = jax.random.PRNGKey(0)
  kx1, kp1, kx2, kp2 = jax.random.split(key, 4)
  fwd = jax.jit(masked_residual_block)

  # Small-channel config (folded, lane-dense kernel; bf16 MXU operands with
  # f32 accumulate -> ~bf16-level tolerance vs the f32 reference).
  N, C, H, W = 2, 8, 16, 16            # n_channels=8 -> hidden channels = 4
  x = jax.random.normal(kx1, (N, C, H, W), jnp.float32)
  params = init_params(kp1, C)
  out = jax.block_until_ready(fwd(x, params))
  ref = jnp.transpose(
      reference_nhwc(jnp.transpose(x, (0, 2, 3, 1)), params), (0, 3, 1, 2))
  np.testing.assert_allclose(np.asarray(out), np.asarray(ref),
                             rtol=2e-2, atol=2e-2)

  # Wide-channel config (channels-on-lanes kernel, bf16 MXU operands, f32
  # accumulation and elementwise tail).
  N2, C2c, H2, W2 = 2, 256, 8, 8
  x2 = jax.random.normal(kx2, (N2, C2c, H2, W2), jnp.float32)
  params2 = init_params(kp2, C2c)
  out2 = jax.block_until_ready(fwd(x2, params2))
  ref2 = jnp.transpose(
      reference_nhwc(jnp.transpose(x2, (0, 2, 3, 1)), params2), (0, 3, 1, 2))
  np.testing.assert_allclose(np.asarray(out2), np.asarray(ref2),
                             rtol=2e-2, atol=2e-2)

  print("KERNEL_OK")
</pallas_src>

<mosaic_0001>
module attributes {stable_mosaic.version = 11 : i64} {
  func.func @_folded_resblock_kernel(%arg0: i32, %arg1: memref<2x16x128xf32, #tpu.memory_space<vmem>>, %arg2: memref<128x64xbf16, #tpu.memory_space<vmem>>, %arg3: memref<1x64xf32, #tpu.memory_space<vmem>>, %arg4: memref<64x64xbf16, #tpu.memory_space<vmem>>, %arg5: memref<64x64xbf16, #tpu.memory_space<vmem>>, %arg6: memref<1x64xf32, #tpu.memory_space<vmem>>, %arg7: memref<64x128xbf16, #tpu.memory_space<vmem>>, %arg8: memref<1x128xf32, #tpu.memory_space<vmem>>, %arg9: memref<2x16x128xf32, #tpu.memory_space<vmem>>) attributes {dimension_semantics = [#tpu.dimension_semantics<parallel>], iteration_bounds = array<i64: 1>, scalar_prefetch = 0 : i64, scratch_operands = 0 : i64, tpu.core_type = #tpu.core_type<tc>, window_params = [{transform_indices = @transform_0, window_bounds = array<i64: 2, 16, 128>}, {pipeline_mode = #tpu.pipeline_mode<synchronous>, transform_indices = @transform_1, window_bounds = array<i64: 128, 64>}, {pipeline_mode = #tpu.pipeline_mode<synchronous>, transform_indices = @transform_2, window_bounds = array<i64: 1, 64>}, {pipeline_mode = #tpu.pipeline_mode<synchronous>, transform_indices = @transform_3, window_bounds = array<i64: 64, 64>}, {pipeline_mode = #tpu.pipeline_mode<synchronous>, transform_indices = @transform_4, window_bounds = array<i64: 64, 64>}, {pipeline_mode = #tpu.pipeline_mode<synchronous>, transform_indices = @transform_5, window_bounds = array<i64: 1, 64>}, {pipeline_mode = #tpu.pipeline_mode<synchronous>, transform_indices = @transform_6, window_bounds = array<i64: 64, 128>}, {pipeline_mode = #tpu.pipeline_mode<synchronous>, transform_indices = @transform_7, window_bounds = array<i64: 1, 128>}, {transform_indices = @transform_8, window_bounds = array<i64: 2, 16, 128>}]} {
    %c0 = arith.constant 0 : index
    %c0_0 = arith.constant 0 : index
    %c0_1 = arith.constant 0 : index
    %0 = vector.load %arg1[%c0, %c0_0, %c0_1] : memref<2x16x128xf32, #tpu.memory_space<vmem>>, vector<2x16x128xf32>
    %1 = vector.shape_cast %0 : vector<2x16x128xf32> to vector<32x128xf32>
    %2 = arith.truncf %1 : vector<32x128xf32> to vector<32x128xbf16>
    %c0_2 = arith.constant 0 : index
    %c0_3 = arith.constant 0 : index
    %3 = vector.load %arg2[%c0_2, %c0_3] : memref<128x64xbf16, #tpu.memory_space<vmem>>, vector<128x64xbf16>
    %cst = arith.constant dense<0.000000e+00> : vector<32x64xf32>
    %4 = tpu.matmul %2, %3, %cst {dimension_numbers = #tpu.dot_dimension_numbers<[1], [0], [0], [1], [0, 0, 1, 1], [], []>} : vector<32x128xbf16>, vector<128x64xbf16>, vector<32x64xf32> -> vector<32x64xf32>
    %c0_4 = arith.constant 0 : index
    %c0_5 = arith.constant 0 : index
    %5 = vector.load %arg3[%c0_4, %c0_5] : memref<1x64xf32, #tpu.memory_space<vmem>>, vector<1x64xf32>
    %6 = vector.broadcast %5 : vector<1x64xf32> to vector<32x64xf32>
    %7 = arith.addf %4, %6 : vector<32x64xf32>
    %cst_6 = arith.constant 0.000000e+00 : f32
    %8 = vector.broadcast %cst_6 : f32 to vector<32x64xf32>
    %9 = arith.maximumf %7, %8 : vector<32x64xf32>
    %10 = tpu.iota {dimensions = array<i32: 0>} : vector<32x1xi32>
    %c16_i32 = arith.constant 16 : i32
    %c0_i32 = arith.constant 0 : i32
    %11 = arith.cmpi eq, %c16_i32, %c0_i32 : i32
    %c1_i32 = arith.constant 1 : i32
    %12 = arith.select %11, %c1_i32, %c16_i32 : i32
    %13 = vector.broadcast %12 : i32 to vector<32x1xi32>
    %14 = arith.remsi %10, %13 : vector<32x1xi32>
    %c0_i32_7 = arith.constant 0 : i32
    %15 = vector.broadcast %c0_i32_7 : i32 to vector<32x1xi32>
    %16 = arith.cmpi ne, %14, %15 : vector<32x1xi32>
    %c0_i32_8 = arith.constant 0 : i32
    %17 = vector.broadcast %c0_i32_8 : i32 to vector<32x1xi32>
    %18 = arith.cmpi slt, %14, %17 : vector<32x1xi32>
    %c0_i32_9 = arith.constant 0 : i32
    %19 = arith.cmpi slt, %12, %c0_i32_9 : i32
    %20 = vector.broadcast %19 : i1 to vector<32x1xi1>
    %21 = vector.broadcast %20 : vector<32x1xi1> to vector<32x1xi1>
    %22 = arith.xori %18, %21 : vector<32x1xi1>
    %23 = arith.andi %22, %16 : vector<32x1xi1>
    %24 = vector.broadcast %12 : i32 to vector<32x1xi32>
    %25 = arith.addi %14, %24 : vector<32x1xi32>
    %26 = arith.select %23, %25, %14 : vector<32x1xi1>, vector<32x1xi32>
    %c0_i32_10 = arith.constant 0 : i32
    %27 = vector.broadcast %c0_i32_10 : i32 to vector<32x1xi32>
    %28 = arith.cmpi sgt, %26, %27 : vector<32x1xi32>
    %c1_i32_11 = arith.constant 1 : i32
    %29 = tpu.dynamic_rotate %9 by %c1_i32_11 dim 0 : vector<32x64xf32>, i32 -> vector<32x64xf32>
    %cst_12 = arith.constant 0.000000e+00 : f32
    %30 = vector.shape_cast %28 : vector<32x1xi1> to vector<32x1xi1>
    %31 = vector.broadcast %30 : vector<32x1xi1> to vector<32x64xi1>
    %32 = vector.broadcast %cst_12 : f32 to vector<32x64xf32>
    %33 = arith.select %31, %29, %32 : vector<32x64xi1>, vector<32x64xf32>
    %34 = arith.truncf %33 : vector<32x64xf32> to vector<32x64xbf16>
    %c0_13 = arith.constant 0 : index
    %c0_14 = arith.constant 0 : index
    %35 = vector.load %arg4[%c0_13, %c0_14] : memref<64x64xbf16, #tpu.memory_space<vmem>>, vector<64x64xbf16>
    %cst_15 = arith.constant dense<0.000000e+00> : vector<32x64xf32>
    %36 = tpu.matmul %34, %35, %cst_15 {dimension_numbers = #tpu.dot_dimension_numbers<[1], [0], [0], [1], [0, 0, 1, 1], [], []>} : vector<32x64xbf16>, vector<64x64xbf16>, vector<32x64xf32> -> vector<32x64xf32>
    %37 = arith.truncf %9 : vector<32x64xf32> to vector<32x64xbf16>
    %c0_16 = arith.constant 0 : index
    %c0_17 = arith.constant 0 : index
    %38 = vector.load %arg5[%c0_16, %c0_17] : memref<64x64xbf16, #tpu.memory_space<vmem>>, vector<64x64xbf16>
    %cst_18 = arith.constant dense<0.000000e+00> : vector<32x64xf32>
    %39 = tpu.matmul %37, %38, %cst_18 {dimension_numbers = #tpu.dot_dimension_numbers<[1], [0], [0], [1], [0, 0, 1, 1], [], []>} : vector<32x64xbf16>, vector<64x64xbf16>, vector<32x64xf32> -> vector<32x64xf32>
    %40 = arith.addf %36, %39 : vector<32x64xf32>
    %c0_19 = arith.constant 0 : index
    %c0_20 = arith.constant 0 : index
    %41 = vector.load %arg6[%c0_19, %c0_20] : memref<1x64xf32, #tpu.memory_space<vmem>>, vector<1x64xf32>
    %42 = vector.broadcast %41 : vector<1x64xf32> to vector<32x64xf32>
    %43 = arith.addf %40, %42 : vector<32x64xf32>
    %cst_21 = arith.constant 0.000000e+00 : f32
    %44 = vector.broadcast %cst_21 : f32 to vector<32x64xf32>
    %45 = arith.maximumf %43, %44 : vector<32x64xf32>
    %46 = arith.truncf %45 : vector<32x64xf32> to vector<32x64xbf16>
    %c0_22 = arith.constant 0 : index
    %c0_23 = arith.constant 0 : index
    %47 = vector.load %arg7[%c0_22, %c0_23] : memref<64x128xbf16, #tpu.memory_space<vmem>>, vector<64x128xbf16>
    %cst_24 = arith.constant dense<0.000000e+00> : vector<32x128xf32>
    %48 = tpu.matmul %46, %47, %cst_24 {dimension_numbers = #tpu.dot_dimension_numbers<[1], [0], [0], [1], [0, 0, 1, 1], [], []>} : vector<32x64xbf16>, vector<64x128xbf16>, vector<32x128xf32> -> vector<32x128xf32>
    %c0_25 = arith.constant 0 : index
    %c0_26 = arith.constant 0 : index
    %49 = vector.load %arg8[%c0_25, %c0_26] : memref<1x128xf32, #tpu.memory_space<vmem>>, vector<1x128xf32>
    %50 = vector.broadcast %49 : vector<1x128xf32> to vector<32x128xf32>
    %51 = arith.addf %48, %50 : vector<32x128xf32>
    %cst_27 = arith.constant 0.000000e+00 : f32
    %52 = vector.broadcast %cst_27 : f32 to vector<32x128xf32>
    %53 = arith.maximumf %51, %52 : vector<32x128xf32>
    %54 = arith.addf %1, %53 : vector<32x128xf32>
    %55 = vector.shape_cast %54 : vector<32x128xf32> to vector<2x16x128xf32>
    %c0_28 = arith.constant 0 : index
    %c0_29 = arith.constant 0 : index
    %c0_30 = arith.constant 0 : index
    %56 = vector.load %arg9[%c0_28, %c0_29, %c0_30] : memref<2x16x128xf32, #tpu.memory_space<vmem>>, vector<2x16x128xf32>
    tpu.vector_store %arg9[%c0_28, %c0_29, %c0_30], %55 {strides = array<i32>} : memref<2x16x128xf32, #tpu.memory_space<vmem>>, vector<2x16x128xf32>,
    return
  }
  func.func @transform_0(%arg0: i32) -> (i32, i32, i32) {
    %c0_i32 = arith.constant 0 : i32
    %c0_i32_0 = arith.constant 0 : i32
    %c0_i32_1 = arith.constant 0 : i32
    return %arg0, %c0_i32, %c0_i32_0 : i32, i32, i32
  }
  func.func @transform_1(%arg0: i32) -> (i32, i32) {
    %c0_i32 = arith.constant 0 : i32
    %c0_i32_0 = arith.constant 0 : i32
    %c0_i32_1 = arith.constant 0 : i32
    return %c0_i32, %c0_i32_0 : i32, i32
  }
  func.func @transform_2(%arg0: i32) -> (i32, i32) {
    %c0_i32 = arith.constant 0 : i32
    %c0_i32_0 = arith.constant 0 : i32
    %c0_i32_1 = arith.constant 0 : i32
    return %c0_i32, %c0_i32_0 : i32, i32
  }
  func.func @transform_3(%arg0: i32) -> (i32, i32) {
    %c0_i32 = arith.constant 0 : i32
    %c0_i32_0 = arith.constant 0 : i32
    %c0_i32_1 = arith.constant 0 : i32
    return %c0_i32, %c0_i32_0 : i32, i32
  }
  func.func @transform_4(%arg0: i32) -> (i32, i32) {
    %c0_i32 = arith.constant 0 : i32
    %c0_i32_0 = arith.constant 0 : i32
    %c0_i32_1 = arith.constant 0 : i32
    return %c0_i32, %c0_i32_0 : i32, i32
  }
  func.func @transform_5(%arg0: i32) -> (i32, i32) {
    %c0_i32 = arith.constant 0 : i32
    %c0_i32_0 = arith.constant 0 : i32
    %c0_i32_1 = arith.constant 0 : i32
    return %c0_i32, %c0_i32_0 : i32, i32
  }
  func.func @transform_6(%arg0: i32) -> (i32, i32) {
    %c0_i32 = arith.constant 0 : i32
    %c0_i32_0 = arith.constant 0 : i32
    %c0_i32_1 = arith.constant 0 : i32
    return %c0_i32, %c0_i32_0 : i32, i32
  }
  func.func @transform_7(%arg0: i32) -> (i32, i32) {
    %c0_i32 = arith.constant 0 : i32
    %c0_i32_0 = arith.constant 0 : i32
    %c0_i32_1 = arith.constant 0 : i32
    return %c0_i32, %c0_i32_0 : i32, i32
  }
  func.func @transform_8(%arg0: i32) -> (i32, i32, i32) {
    %c0_i32 = arith.constant 0 : i32
    %c0_i32_0 = arith.constant 0 : i32
    %c0_i32_1 = arith.constant 0 : i32
    return %arg0, %c0_i32, %c0_i32_0 : i32, i32, i32
  }
}

</mosaic_0001>

<llo_original>
// kernel: tile.14
$region0: #{tile.14}
  #allocation0 [shape = 's32[1]{0}', space=sflag, size = 0x4, scoped, tag = 'scoped memory for tile.14']
  %s0 = inlined_call_operand.vmem [shape: f32[4], index: 0, kind: input, shape index: {}]
  %s1 = inlined_call_operand.vmem [shape: f32[16,4], index: 1, kind: output, shape index: {}]
  // Predicated region
  $region2: #{tile.14} parent=0 // pred_check
    _
  $region3: #{tile.14} parent=0 // pred_check_branch
    %3 = sbr.rel (0) target = $region5
  $region4: #{tile.14} parent=0 // pred_region
    _
  $region5: #{tile.14} parent=0 // pred_fallthru
    _
  %v4 = vld [vmem:[%s0] ss:$0 sm:$0xff]
  %5 = vst [vmem:[%s1] sm:$0xff] %v4
  %s6 = scalar_lea.vmem %s1, 8
  %7 = vst [vmem:[%s6] sm:$0xff] %v4

// kernel: tile.15
$region0: #{tile.15}
  %s0 = inlined_call_operand.vmem [shape: f32[16,4], index: 0, kind: input, shape index: {}]
  %s1 = inlined_call_operand.hbm [shape: f32[1,64], index: 1, kind: output, shape index: {}]
  $region1: #{tile.15} parent=0
    #allocation0 [shape = 'u8[512]{0}', space=vmem, size = 0x400, scoped, tag = 'operand span for operand 1']
    #allocation1 [shape = 's32[1]{0}', space=sflag, size = 0x4, scoped, tag = 'scoped memory for tile.15']
    #allocation2 [shape = 'u8[4096]{0}', space=vmem, size = 0x1000, scoped, tag = 'scoped mem for output reshape']
    %2 = vsyncpa [#allocation1], 0
    %v3 = vld [vmem:[%s0] sm:$0x1]
    %vm4 = vcmask 31744
    %5 = vst.msk [vmem:[#allocation2] sm:$0x1] %vm4, %v3
    %s6 = scalar_lea.vmem %s0, 15
    %v7 = vld [vmem:[%s6] sm:$0x1]
    %8 = vrot.lane.b32.xlu0 %v7, 60
    %v9 = vpop.permute.xlu0 %8
    %vm10 = vcmask 523744
    %11 = vst.msk [vmem:[#allocation2] sm:$0x1] %vm10, %v9
    %s12 = scalar_lea.vmem %s0, 14
    %v13 = vld [vmem:[%s12] sm:$0x1]
    %14 = vrot.lane.b32.xlu0 %v13, 56
    %v15 = vpop.permute.xlu0 %14
    %vm16 = vcmask 490944
    %17 = vst.msk [vmem:[#allocation2] sm:$0x1] %vm16, %v15
    %s18 = scalar_lea.vmem %s0, 13
    %v19 = vld [vmem:[%s18] sm:$0x1]
    %20 = vrot.lane.b32.xlu0 %v19, 52
    %v21 = vpop.permute.xlu0 %20
    %vm22 = vcmask 458144
    %23 = vst.msk [vmem:[#allocation2] sm:$0x1] %vm22, %v21
    %s24 = scalar_lea.vmem %s0, 12
    %v25 = vld [vmem:[%s24] sm:$0x1]
    %26 = vrot.lane.b32.xlu0 %v25, 48
    %v27 = vpop.permute.xlu0 %26
    %vm28 = vcmask 425344
    %29 = vst.msk [vmem:[#allocation2] sm:$0x1] %vm28, %v27
    %s30 = scalar_lea.vmem %s0, 11
    %v31 = vld [vmem:[%s30] sm:$0x1]
    %32 = vrot.lane.b32.xlu0 %v31, 44
    %v33 = vpop.permute.xlu0 %32
    %vm34 = vcmask 392544
    %35 = vst.msk [vmem:[#allocation2] sm:$0x1] %vm34, %v33
    %s36 = scalar_lea.vmem %s0, 10
    %v37 = vld [vmem:[%s36] sm:$0x1]
    %38 = vrot.lane.b32.xlu0 %v37, 40
    %v39 = vpop.permute.xlu0 %38
    %vm40 = vcmask 359744
    %41 = vst.msk [vmem:[#allocation2] sm:$0x1] %vm40, %v39
    %s42 = scalar_lea.vmem %s0, 9
    %v43 = vld [vmem:[%s42] sm:$0x1]
    %44 = vrot.lane.b32.xlu0 %v43, 36
    %v45 = vpop.permute.xlu0 %44
    %vm46 = vcmask 326944
    %47 = vst.msk [vmem:[#allocation2] sm:$0x1] %vm46, %v45
    %s48 = scalar_lea.vmem %s0, 8
    %v49 = vld [vmem:[%s48] sm:$0x1]
    %50 = vrot.lane.b32.xlu0 %v49, 32
    %v51 = vpop.permute.xlu0 %50
    %vm52 = vcmask 294144
    %53 = vst.msk [vmem:[#allocation2] sm:$0x1] %vm52, %v51
    %s54 = scalar_lea.vmem %s0, 7
    %v55 = vld [vmem:[%s54] sm:$0x1]
    %56 = vrot.lane.b32.xlu0 %v55, 28
    %v57 = vpop.permute.xlu0 %56
    %vm58 = vcmask 261344
    %59 = vst.msk [vmem:[#allocation2] sm:$0x1] %vm58, %v57
    %s60 = scalar_lea.vmem %s0, 6
    %v61 = vld [vmem:[%s60] sm:$0x1]
    %62 = vrot.lane.b32.xlu0 %v61, 24
    %v63 = vpop.permute.xlu0 %62
    %vm64 = vcmask 228544
    %65 = vst.msk [vmem:[#allocation2] sm:$0x1] %vm64, %v63
    %s66 = scalar_lea.vmem %s0, 5
    %v67 = vld [vmem:[%s66] sm:$0x1]
    %68 = vrot.lane.b32.xlu0 %v67, 20
    %v69 = vpop.permute.xlu0 %68
    %vm70 = vcmask 195744
    %71 = vst.msk [vmem:[#allocation2] sm:$0x1] %vm70, %v69
    %s72 = scalar_lea.vmem %s0, 4
    %v73 = vld [vmem:[%s72] sm:$0x1]
    %74 = vrot.lane.b32.xlu0 %v73, 16
    %v75 = vpop.permute.xlu0 %74
    %vm76 = vcmask 162944
    %77 = vst.msk [vmem:[#allocation2] sm:$0x1] %vm76, %v75
    %s78 = scalar_lea.vmem %s0, 3
    %v79 = vld [vmem:[%s78] sm:$0x1]
    %80 = vrot.lane.b32.xlu0 %v79, 12
    %v81 = vpop.permute.xlu0 %80
    %vm82 = vcmask 130144
    %83 = vst.msk [vmem:[#allocation2] sm:$0x1] %vm82, %v81
    %s84 = scalar_lea.vmem %s0, 2
    %v85 = vld [vmem:[%s84] sm:$0x1]
    %86 = vrot.lane.b32.xlu0 %v85, 8
    %v87 = vpop.permute.xlu0 %86
    %vm88 = vcmask 97344
    %89 = vst.msk [vmem:[#allocation2] sm:$0x1] %vm88, %v87
    %s90 = scalar_lea.vmem %s0, 1
    %v91 = vld [vmem:[%s90] sm:$0x1]
    %92 = vrot.lane.b32.xlu0 %v91, 4
    %v93 = vpop.permute.xlu0 %92
    %vm94 = vcmask 64544
    %95 = vst.msk [vmem:[#allocation2] sm:$0x1] %vm94, %v93
    %s97 = sshllo.u32 0, 1
    %v99 = vld [vmem:[#allocation2] sm:%s97]
    %s100 = sshllo.u32 0, 1
    %101 = vst [vmem:[#allocation0] sm:%s100] %v99
    %s103 = ssub.s32 16, 16
    %104 = vsyncadd [#allocation1], %s103
    %s106 = sshll.u32 [#allocation0], 4
    %s107 = int_to_ptr.vmem [resolvable:$true] %s106
    %109 = dma.vmem_to_hbm [thread:$0]  %s107, 16, %s1, [#allocation1]
    %110 = dma.done [#allocation1], 16
    %111 = vsyncpa [#allocation1], 1

// kernel: tile.22
$region0: #{tile.22}
  #allocation0 [shape = 's32[1]{0}', space=sflag, size = 0x4, scoped, tag = 'scoped memory for tile.22']
  %s0 = inlined_call_operand.vmem [shape: f32[8], index: 0, kind: input, shape index: {}]
  %s1 = inlined_call_operand.vmem [shape: f32[16,8], index: 1, kind: output, shape index: {}]
  // Predicated region
  $region2: #{tile.22} parent=0 // pred_check
    _
  $region3: #{tile.22} parent=0 // pred_check_branch
    %3 = sbr.rel (0) target = $region5
  $region4: #{tile.22} parent=0 // pred_region
    _
  $region5: #{tile.22} parent=0 // pred_fallthru
    _
  %v4 = vld [vmem:[%s0] ss:$0 sm:$0xff]
  %5 = vst [vmem:[%s1] sm:$0xff] %v4
  %s6 = scalar_lea.vmem %s1, 8
  %7 = vst [vmem:[%s6] sm:$0xff] %v4

// kernel: tile.23
$region0: #{tile.23}
  %s0 = inlined_call_operand.vmem [shape: f32[16,8], index: 0, kind: input, shape index: {}]
  %s1 = inlined_call_operand.hbm [shape: f32[1,128], index: 1, kind: output, shape index: {}]
  $region1: #{tile.23} parent=0
    #allocation0 [shape = 'u8[512]{0}', space=vmem, size = 0x400, scoped, tag = 'operand span for operand 1']
    #allocation1 [shape = 's32[1]{0}', space=sflag, size = 0x4, scoped, tag = 'scoped memory for tile.23']
    #allocation2 [shape = 'u8[4096]{0}', space=vmem, size = 0x1000, scoped, tag = 'scoped mem for output reshape']
    %2 = vsyncpa [#allocation1], 0
    %v3 = vld [vmem:[%s0] sm:$0x1]
    %vm4 = vcmask 64512
    %5 = vst.msk [vmem:[#allocation2] sm:$0x1] %vm4, %v3
    %s6 = scalar_lea.vmem %s0, 15
    %v7 = vld [vmem:[%s6] sm:$0x1]
    %8 = vrot.lane.b32.xlu0 %v7, 120
    %v9 = vpop.permute.xlu0 %8
    %vm10 = vcmask 1048512
    %11 = vst.msk [vmem:[#allocation2] sm:$0x1] %vm10, %v9
    %s12 = scalar_lea.vmem %s0, 14
    %v13 = vld [vmem:[%s12] sm:$0x1]
    %14 = vrot.lane.b32.xlu0 %v13, 112
    %v15 = vpop.permute.xlu0 %14
    %vm16 = vcmask 982912
    %17 = vst.msk [vmem:[#allocation2] sm:$0x1] %vm16, %v15
    %s18 = scalar_lea.vmem %s0, 13
    %v19 = vld [vmem:[%s18] sm:$0x1]
    %20 = vrot.lane.b32.xlu0 %v19, 104
    %v21 = vpop.permute.xlu0 %20
    %vm22 = vcmask 917312
    %23 = vst.msk [vmem:[#allocation2] sm:$0x1] %vm22, %v21
    %s24 = scalar_lea.vmem %s0, 12
    %v25 = vld [vmem:[%s24] sm:$0x1]
    %26 = vrot.lane.b32.xlu0 %v25, 96
    %v27 = vpop.permute.xlu0 %26
    %vm28 = vcmask 851712
    %29 = vst.msk [vmem:[#allocation2] sm:$0x1] %vm28, %v27
    %s30 = scalar_lea.vmem %s0, 11
    %v31 = vld [vmem:[%s30] sm:$0x1]
    %32 = vrot.lane.b32.xlu0 %v31, 88
    %v33 = vpop.permute.xlu0 %32
    %vm34 = vcmask 786112
    %35 = vst.msk [vmem:[#allocation2] sm:$0x1] %vm34, %v33
    %s36 = scalar_lea.vmem %s0, 10
    %v37 = vld [vmem:[%s36] sm:$0x1]
    %38 = vrot.lane.b32.xlu0 %v37, 80
    %v39 = vpop.permute.xlu0 %38
    %vm40 = vcmask 720512
    %41 = vst.msk [vmem:[#allocation2] sm:$0x1] %vm40, %v39
    %s42 = scalar_lea.vmem %s0, 9
    %v43 = vld [vmem:[%s42] sm:$0x1]
    %44 = vrot.lane.b32.xlu0 %v43, 72
    %v45 = vpop.permute.xlu0 %44
    %vm46 = vcmask 654912
    %47 = vst.msk [vmem:[#allocation2] sm:$0x1] %vm46, %v45
    %s48 = scalar_lea.vmem %s0, 8
    %v49 = vld [vmem:[%s48] sm:$0x1]
    %50 = vrot.lane.b32.xlu0 %v49, 64
    %v51 = vpop.permute.xlu0 %50
    %vm52 = vcmask 589312
    %53 = vst.msk [vmem:[#allocation2] sm:$0x1] %vm52, %v51
    %s54 = scalar_lea.vmem %s0, 7
    %v55 = vld [vmem:[%s54] sm:$0x1]
    %56 = vrot.lane.b32.xlu0 %v55, 56
    %v57 = vpop.permute.xlu0 %56
    %vm58 = vcmask 523712
    %59 = vst.msk [vmem:[#allocation2] sm:$0x1] %vm58, %v57
    %s60 = scalar_lea.vmem %s0, 6
    %v61 = vld [vmem:[%s60] sm:$0x1]
    %62 = vrot.lane.b32.xlu0 %v61, 48
    %v63 = vpop.permute.xlu0 %62
    %vm64 = vcmask 458112
    %65 = vst.msk [vmem:[#allocation2] sm:$0x1] %vm64, %v63
    %s66 = scalar_lea.vmem %s0, 5
    %v67 = vld [vmem:[%s66] sm:$0x1]
    %68 = vrot.lane.b32.xlu0 %v67, 40
    %v69 = vpop.permute.xlu0 %68
    %vm70 = vcmask 392512
    %71 = vst.msk [vmem:[#allocation2] sm:$0x1] %vm70, %v69
    %s72 = scalar_lea.vmem %s0, 4
    %v73 = vld [vmem:[%s72] sm:$0x1]
    %74 = vrot.lane.b32.xlu0 %v73, 32
    %v75 = vpop.permute.xlu0 %74
    %vm76 = vcmask 326912
    %77 = vst.msk [vmem:[#allocation2] sm:$0x1] %vm76, %v75
    %s78 = scalar_lea.vmem %s0, 3
    %v79 = vld [vmem:[%s78] sm:$0x1]
    %80 = vrot.lane.b32.xlu0 %v79, 24
    %v81 = vpop.permute.xlu0 %80
    %vm82 = vcmask 261312
    %83 = vst.msk [vmem:[#allocation2] sm:$0x1] %vm82, %v81
    %s84 = scalar_lea.vmem %s0, 2
    %v85 = vld [vmem:[%s84] sm:$0x1]
    %86 = vrot.lane.b32.xlu0 %v85, 16
    %v87 = vpop.permute.xlu0 %86
    %vm88 = vcmask 195712
    %89 = vst.msk [vmem:[#allocation2] sm:$0x1] %vm88, %v87
    %s90 = scalar_lea.vmem %s0, 1
    %v91 = vld [vmem:[%s90] sm:$0x1]
    %92 = vrot.lane.b32.xlu0 %v91, 8
    %v93 = vpop.permute.xlu0 %92
    %vm94 = vcmask 130112
    %95 = vst.msk [vmem:[#allocation2] sm:$0x1] %vm94, %v93
    %s97 = sshllo.u32 0, 1
    %v99 = vld [vmem:[#allocation2] sm:%s97]
    %s100 = sshllo.u32 0, 1
    %101 = vst [vmem:[#allocation0] sm:%s100] %v99
    %s103 = ssub.s32 16, 16
    %104 = vsyncadd [#allocation1], %s103
    %s106 = sshll.u32 [#allocation0], 4
    %s107 = int_to_ptr.vmem [resolvable:$true] %s106
    %109 = dma.vmem_to_hbm [thread:$0]  %s107, 16, %s1, [#allocation1]
    %110 = dma.done [#allocation1], 16
    %111 = vsyncpa [#allocation1], 1

// kernel: masked_residual_block.1
$region0: #{masked_residual_block.1}
  #allocation0 [shape = 'u32[]', space=smem, size = 0x4, offset = 0x4, fixed_abs, tag = 'smem constant byte address 0x4 - core index']
  #allocation1 [shape = 'u32[144,128]{1,0:T(1,128)}', space=vmem, size = 0x12000, scoped, tag = 'internal scratch']
  %s0 = inlined_call_operand.hbm [shape: f32[2,16,128], index: 0, kind: input, shape index: {}]
  %s1 = inlined_call_operand.hbm [shape: bf16[128,64], index: 1, kind: input, shape index: {}]
  %s2 = inlined_call_operand.hbm [shape: f32[1,64], index: 2, kind: input, shape index: {}]
  %s3 = inlined_call_operand.hbm [shape: bf16[64,64], index: 3, kind: input, shape index: {}]
  %s4 = inlined_call_operand.hbm [shape: bf16[64,64], index: 4, kind: input, shape index: {}]
  %s5 = inlined_call_operand.hbm [shape: f32[1,64], index: 5, kind: input, shape index: {}]
  %s6 = inlined_call_operand.hbm [shape: bf16[64,128], index: 6, kind: input, shape index: {}]
  %s7 = inlined_call_operand.hbm [shape: f32[1,128], index: 7, kind: input, shape index: {}]
  %s8 = inlined_call_operand.hbm [shape: f32[2,16,128], index: 8, kind: output, shape index: {}]
  %s9 = sld [smem:[#allocation0]]
  $region74: #{masked_residual_block.1} parent=0
    _
  %s11 = ssub.s32 1, %s9
  %s12 = scalar_select 0, %s11, %s9
  $region1: #{masked_residual_block.1} parent=0
    #allocation2 [shape = 'u8[16384]{0}', space=vmem, size = 0x4000, scoped, tag = 'input window, operand 0, single buffered']
    #allocation3 [shape = 's32[1]{0}', space=sflag, size = 0x4, scoped, tag = 'scoped memory for masked_residual_block.1']
    #allocation4 [shape = 's32[1]{0}', space=sflag, size = 0x4, scoped, tag = 'scoped memory for masked_residual_block.1']
    #allocation5 [shape = 'u8[32768]{0}', space=vmem, size = 0x8000, scoped, tag = 'input window, operand 1, single buffered']
    #allocation6 [shape = 's32[1]{0}', space=sflag, size = 0x4, scoped, tag = 'scoped memory for masked_residual_block.1']
    #allocation7 [shape = 'u8[512]{0}', space=vmem, size = 0x400, scoped, tag = 'input window, operand 2, single buffered']
    #allocation8 [shape = 'u8[16384]{0}', space=vmem, size = 0x4000, scoped, tag = 'input window, operand 3, single buffered']
    #allocation9 [shape = 's32[1]{0}', space=sflag, size = 0x4, scoped, tag = 'scoped memory for masked_residual_block.1']
    #allocation10 [shape = 'u8[16384]{0}', space=vmem, size = 0x4000, scoped, tag = 'input window, operand 4, single buffered']
    #allocation11 [shape = 'u8[512]{0}', space=vmem, size = 0x400, scoped, tag = 'input window, operand 5, single buffered']
    #allocation12 [shape = 's32[1]{0}', space=sflag, size = 0x4, scoped, tag = 'scoped memory for masked_residual_block.1']
    #allocation13 [shape = 'u8[16384]{0}', space=vmem, size = 0x4000, scoped, tag = 'input window, operand 6, single buffered']
    #allocation14 [shape = 'u8[512]{0}', space=vmem, size = 0x400, scoped, tag = 'input window, operand 7, single buffered']
    #allocation15 [shape = 's32[1]{0}', space=sflag, size = 0x4, scoped, tag = 'scoped memory for masked_residual_block.1']
    #allocation16 [shape = 'u8[16384]{0}', space=vmem, size = 0x4000, scoped, tag = 'output window, operand 0, single buffered']
    %13 = vsyncpa [#allocation3], 0
    %14 = vsyncpa [#allocation6], 0
    %15 = vsyncpa [#allocation9], 0
    %16 = vsyncpa [#allocation12], 0
    %17 = vsyncpa [#allocation15], 0
    %18 = vsyncpa [#allocation4], 0
    // Predicated region
    $region2: #{masked_residual_block.1} parent=1 // pred_check
      _
    $region3: #{masked_residual_block.1} parent=1 // pred_check_branch
      %20 = sbr.rel (0) target = $region5
    $region4: #{masked_residual_block.1} parent=1 // pred_region
      %s22 = ssub.s32 512, 512
      %23 = vsyncadd [#allocation3], %s22
      %s24 = sshll.u32 [#allocation2], 4
      %s25 = int_to_ptr.vmem [resolvable:$true] %s24
      %30 = dma.hbm_to_vmem [thread:$0]  %s0, 512, %s25, [#allocation3], 128, 128, 8
    $region5: #{masked_residual_block.1} parent=1 // pred_fallthru
      _
    // Predicated region
    $region6: #{masked_residual_block.1} parent=1 // pred_check
      _
    $region7: #{masked_residual_block.1} parent=1 // pred_check_branch
      %32 = sbr.rel (0) target = $region9
    $region8: #{masked_residual_block.1} parent=1 // pred_region
      %s34 = ssub.s32 1024, 1024
      %35 = vsyncadd [#allocation6], %s34
      %s36 = sshll.u32 [#allocation5], 4
      %s37 = int_to_ptr.vmem [resolvable:$true] %s36
      %42 = dma.hbm_to_vmem [thread:$0]  %s1, 1024, %s37, [#allocation6], 64, 64, 4
    $region9: #{masked_residual_block.1} parent=1 // pred_fallthru
      _
    // Predicated region
    $region10: #{masked_residual_block.1} parent=1 // pred_check
      _
    $region11: #{masked_residual_block.1} parent=1 // pred_check_branch
      %44 = sbr.rel (0) target = $region13
    $region12: #{masked_residual_block.1} parent=1 // pred_region
      %s46 = ssub.s32 16, 16
      %47 = vsyncadd [#allocation6], %s46
      %s49 = sshll.u32 [#allocation7], 4
      %s50 = int_to_ptr.vmem [resolvable:$true] %s49
      %52 = dma.hbm_to_vmem [thread:$0]  %s2, 16, %s50, [#allocation6]
    $region13: #{masked_residual_block.1} parent=1 // pred_fallthru
      _
    // Predicated region
    $region14: #{masked_residual_block.1} parent=1 // pred_check
      _
    $region15: #{masked_residual_block.1} parent=1 // pred_check_branch
      %54 = sbr.rel (0) target = $region17
    $region16: #{masked_residual_block.1} parent=1 // pred_region
      %s56 = ssub.s32 512, 512
      %57 = vsyncadd [#allocation9], %s56
      %s58 = sshll.u32 [#allocation8], 4
      %s59 = int_to_ptr.vmem [resolvable:$true] %s58
      %64 = dma.hbm_to_vmem [thread:$0]  %s3, 512, %s59, [#allocation9], 64, 64, 4
    $region17: #{masked_residual_block.1} parent=1 // pred_fallthru
      _
    // Predicated region
    $region18: #{masked_residual_block.1} parent=1 // pred_check
      _
    $region19: #{masked_residual_block.1} parent=1 // pred_check_branch
      %66 = sbr.rel (0) target = $region21
    $region20: #{masked_residual_block.1} parent=1 // pred_region
      %s68 = ssub.s32 512, 512
      %69 = vsyncadd [#allocation9], %s68
      %s70 = sshll.u32 [#allocation10], 4
      %s71 = int_to_ptr.vmem [resolvable:$true] %s70
      %76 = dma.hbm_to_vmem [thread:$0]  %s4, 512, %s71, [#allocation9], 64, 64, 4
    $region21: #{masked_residual_block.1} parent=1 // pred_fallthru
      _
    // Predicated region
    $region22: #{masked_residual_block.1} parent=1 // pred_check
      _
    $region23: #{masked_residual_block.1} parent=1 // pred_check_branch
      %78 = sbr.rel (0) target = $region25
    $region24: #{masked_residual_block.1} parent=1 // pred_region
      %s80 = ssub.s32 16, 16
      %81 = vsyncadd [#allocation12], %s80
      %s83 = sshll.u32 [#allocation11], 4
      %s84 = int_to_ptr.vmem [resolvable:$true] %s83
      %86 = dma.hbm_to_vmem [thread:$0]  %s5, 16, %s84, [#allocation12]
    $region25: #{masked_residual_block.1} parent=1 // pred_fallthru
      _
    // Predicated region
    $region26: #{masked_residual_block.1} parent=1 // pred_check
      _
    $region27: #{masked_residual_block.1} parent=1 // pred_check_branch
      %88 = sbr.rel (0) target = $region29
    $region28: #{masked_residual_block.1} parent=1 // pred_region
      %s90 = ssub.s32 512, 512
      %91 = vsyncadd [#allocation12], %s90
      %s92 = sshll.u32 [#allocation13], 4
      %s93 = int_to_ptr.vmem [resolvable:$true] %s92
      %98 = dma.hbm_to_vmem [thread:$0]  %s6, 512, %s93, [#allocation12], 64, 64, 4
    $region29: #{masked_residual_block.1} parent=1 // pred_fallthru
      _
    // Predicated region
    $region30: #{masked_residual_block.1} parent=1 // pred_check
      _
    $region31: #{masked_residual_block.1} parent=1 // pred_check_branch
      %100 = sbr.rel (0) target = $region33
    $region32: #{masked_residual_block.1} parent=1 // pred_region
      %s102 = ssub.s32 16, 16
      %103 = vsyncadd [#allocation15], %s102
      %s105 = sshll.u32 [#allocation14], 4
      %s106 = int_to_ptr.vmem [resolvable:$true] %s105
      %108 = dma.hbm_to_vmem [thread:$0]  %s7, 16, %s106, [#allocation15]
    $region33: #{masked_residual_block.1} parent=1 // pred_fallthru
      _
    // Predicated region
    $region34: #{masked_residual_block.1} parent=1 // pred_check
      _
    $region35: #{masked_residual_block.1} parent=1 // pred_check_branch
      %110 = sbr.rel (0) target = $region37
    $region36: #{masked_residual_block.1} parent=1 // pred_region
      %111 = dma.done [#allocation3], 512
    $region37: #{masked_residual_block.1} parent=1 // pred_fallthru
      _
    // Predicated region
    $region38: #{masked_residual_block.1} parent=1 // pred_check
      _
    $region39: #{masked_residual_block.1} parent=1 // pred_check_branch
      %113 = sbr.rel (0) target = $region41
    $region40: #{masked_residual_block.1} parent=1 // pred_region
      %114 = dma.done [#allocation6], 1024
    $region41: #{masked_residual_block.1} parent=1 // pred_fallthru
      _
    // Predicated region
    $region42: #{masked_residual_block.1} parent=1 // pred_check
      _
    $region43: #{masked_residual_block.1} parent=1 // pred_check_branch
      %116 = sbr.rel (0) target = $region45
    $region44: #{masked_residual_block.1} parent=1 // pred_region
      %117 = dma.done [#allocation6], 16
    $region45: #{masked_residual_block.1} parent=1 // pred_fallthru
      _
    // Predicated region
    $region46: #{masked_residual_block.1} parent=1 // pred_check
      _
    $region47: #{masked_residual_block.1} parent=1 // pred_check_branch
      %119 = sbr.rel (0) target = $region49
    $region48: #{masked_residual_block.1} parent=1 // pred_region
      %120 = dma.done [#allocation9], 512
    $region49: #{masked_residual_block.1} parent=1 // pred_fallthru
      _
    // Predicated region
    $region50: #{masked_residual_block.1} parent=1 // pred_check
      _
    $region51: #{masked_residual_block.1} parent=1 // pred_check_branch
      %122 = sbr.rel (0) target = $region53
    $region52: #{masked_residual_block.1} parent=1 // pred_region
      %123 = dma.done [#allocation9], 512
    $region53: #{masked_residual_block.1} parent=1 // pred_fallthru
      _
    // Predicated region
    $region54: #{masked_residual_block.1} parent=1 // pred_check
      _
    $region55: #{masked_residual_block.1} parent=1 // pred_check_branch
      %125 = sbr.rel (0) target = $region57
    $region56: #{masked_residual_block.1} parent=1 // pred_region
      %126 = dma.done [#allocation12], 16
    $region57: #{masked_residual_block.1} parent=1 // pred_fallthru
      _
    // Predicated region
    $region58: #{masked_residual_block.1} parent=1 // pred_check
      _
    $region59: #{masked_residual_block.1} parent=1 // pred_check_branch
      %128 = sbr.rel (0) target = $region61
    $region60: #{masked_residual_block.1} parent=1 // pred_region
      %129 = dma.done [#allocation12], 512
    $region61: #{masked_residual_block.1} parent=1 // pred_fallthru
      _
    // Predicated region
    $region62: #{masked_residual_block.1} parent=1 // pred_check
      _
    $region63: #{masked_residual_block.1} parent=1 // pred_check_branch
      %131 = sbr.rel (0) target = $region65
    $region64: #{masked_residual_block.1} parent=1 // pred_region
      %132 = dma.done [#allocation15], 16
    $region65: #{masked_residual_block.1} parent=1 // pred_fallthru
      _
    %v134 = vld [vmem:[#allocation2] sm:$0xff]
    %v135 = vld [vmem:[#allocation2 + $0x8] sm:$0xff]
    %v136 = vld [vmem:[#allocation2 + $0x10] sm:$0xff]
    %v137 = vld [vmem:[#allocation2 + $0x18] sm:$0xff]
    %v138 = vpack.c.bf16 %v135, %v134
    %v139 = vpack.c.bf16 %v137, %v136
    %v140 = vld [vmem:[#allocation5] sm:$0xf]
    %v141 = vld [vmem:[#allocation5 + $0x4] sm:$0xf]
    %v142 = vld [vmem:[#allocation5 + $0x8] sm:$0xf]
    %v143 = vld [vmem:[#allocation5 + $0xc] sm:$0xf]
    %v144 = vld [vmem:[#allocation5 + $0x10] sm:$0xf]
    %v145 = vld [vmem:[#allocation5 + $0x14] sm:$0xf]
    %v146 = vld [vmem:[#allocation5 + $0x18] sm:$0xf]
    %v147 = vld [vmem:[#allocation5 + $0x1c] sm:$0xf]
    %v148 = vld [vmem:[#allocation5 + $0x20] sm:$0xf]
    %v149 = vld [vmem:[#allocation5 + $0x24] sm:$0xf]
    %v150 = vld [vmem:[#allocation5 + $0x28] sm:$0xf]
    %v151 = vld [vmem:[#allocation5 + $0x2c] sm:$0xf]
    %v152 = vld [vmem:[#allocation5 + $0x30] sm:$0xf]
    %v153 = vld [vmem:[#allocation5 + $0x34] sm:$0xf]
    %v154 = vld [vmem:[#allocation5 + $0x38] sm:$0xf]
    %v155 = vld [vmem:[#allocation5 + $0x3c] sm:$0xf]
    %v156 = vld [vmem:[#allocation7] sm:$0x1]
    %v158 = vlaneseq
    %v159 = vshrl.u32 %v158, 7
    %v160 = vsub.s32 0, %v159
    %v161 = vrot.slane %v156, %v160
    %v179 = vunpack.c.l.b16 %v140
    %v180 = vunpack.c.l.b16 %v141
    %v181 = vunpack.c.l.b16 %v142
    %v182 = vunpack.c.l.b16 %v143
    %v183 = vunpack.c.l.b16 %v144
    %v184 = vunpack.c.l.b16 %v145
    %v185 = vunpack.c.l.b16 %v146
    %v186 = vunpack.c.l.b16 %v147
    %v187 = vunpack.c.l.b16 %v148
    %v188 = vunpack.c.l.b16 %v149
    %v189 = vunpack.c.l.b16 %v150
    %v190 = vunpack.c.l.b16 %v151
    %v191 = vunpack.c.l.b16 %v152
    %v192 = vunpack.c.l.b16 %v153
    %v193 = vunpack.c.l.b16 %v154
    %v194 = vunpack.c.l.b16 %v155
    %v195 = vpack.c.b16 %v180, %v179
    %v196 = vpack.c.b16 %v182, %v181
    %v197 = vpack.c.b16 %v184, %v183
    %v198 = vpack.c.b16 %v186, %v185
    %v199 = vpack.c.b16 %v188, %v187
    %v200 = vpack.c.b16 %v190, %v189
    %v201 = vpack.c.b16 %v192, %v191
    %v202 = vpack.c.b16 %v194, %v193
    %211 = vmatprep.subr.bf16.mxu0 0
    %212 = vmatpush1.bf16.msra.mxu0 %v195
    %213 = vmatprep.subr.bf16.mxu0 0
    %214 = vmatpush1.bf16.msra.mxu0 %v196
    %215 = vmatprep.subr.bf16.mxu0 0
    %216 = vmatpush1.bf16.msra.mxu0 %v197
    %217 = vmatprep.subr.bf16.mxu0 0
    %218 = vmatpush1.bf16.msra.mxu0 %v198
    %219 = vmatprep.subr.bf16.mxu0 0
    %220 = vmatpush1.bf16.msra.mxu0 %v199
    %221 = vmatprep.subr.bf16.mxu0 0
    %222 = vmatpush1.bf16.msra.mxu0 %v200
    %223 = vmatprep.subr.bf16.mxu0 0
    %224 = vmatpush1.bf16.msra.mxu0 %v201
    %225 = vmatprep.subr.bf16.mxu0 0
    %226 = vmatpush1.bf16.msra.mxu0 %v202
    %227 = vmatprep.subr.bf16.mxu0 0
    %228 = vmatpush1.bf16.msra.mxu0 0
    %229 = vmatprep.subr.bf16.mxu0 0
    %230 = vmatpush1.bf16.msra.mxu0 0
    %231 = vmatprep.subr.bf16.mxu0 0
    %232 = vmatpush1.bf16.msra.mxu0 0
    %233 = vmatprep.subr.bf16.mxu0 0
    %234 = vmatpush1.bf16.msra.mxu0 0
    %235 = vmatprep.subr.bf16.mxu0 0
    %236 = vmatpush1.bf16.msra.mxu0 0
    %237 = vmatprep.subr.bf16.mxu0 0
    %238 = vmatpush1.bf16.msra.mxu0 0
    %239 = vmatprep.subr.bf16.mxu0 0
    %240 = vmatpush1.bf16.msra.mxu0 0
    %241 = vmatprep.subr.bf16.mxu0 0
    %242 = vmatpush1.bf16.msra.mxu0 0
    %243 = vmatprep.mubr.bf16.mxu0 0
    %244 = vmatmul.mubr.bf16.gmra.mrb[0].mxu0 %v138
    %v245 = vpop.f32.mrb[0].mxu0
    %v246 = vadd.f32 %v161, %v245
    %v247 = vpop.f32.mrb[0].mxu0
    %v248 = vpop.f32.mrb[0].mxu0
    %v249 = vadd.f32 %v161, %v248
    %v250 = vpop.f32.mrb[0].mxu0
    %251 = vmatprep.mubr.bf16.mxu0 0
    %252 = vmatmul.mubr.bf16.gmra.mrb[0].mxu0 %v139
    %v253 = vpop.f32.mrb[0].mxu0
    %v254 = vadd.f32 %v161, %v253
    %v255 = vpop.f32.mrb[0].mxu0
    %v256 = vpop.f32.mrb[0].mxu0
    %v257 = vadd.f32 %v161, %v256
    %v258 = vpop.f32.mrb[0].mxu0
    %259 = vdwg.mxu0
    %v260 = vmax.f32 %v246, 0.0
    %v261 = vmax.f32 %v249, 0.0
    %v262 = vmax.f32 %v254, 0.0
    %v263 = vmax.f32 %v257, 0.0
    %v264 = vlaneseq
    %v265 = vshrl.u32 %v264, 7
    %v266 = vadd.s32 %v265, 8
    %v267 = vadd.s32 %v265, 16
    %v268 = vadd.s32 %v265, 24
    %vm269 = vcmp.lt.s32.totalorder %v265, 0
    %v270 = vsub.s32 0, %v265
    %v271 = vsel %vm269, %v270, %v265
    %v272 = vshrl.u32 %v271, 4
    %v273 = vand.u32 %v271, 15
    %v274 = vsub.s32 0, %v273
    %v275 = vsel %vm269, %v274, %v273
    %vm276 = vcmp.lt.s32.totalorder %v266, 0
    %v277 = vsub.s32 0, %v266
    %v278 = vsel %vm276, %v277, %v266
    %v279 = vshrl.u32 %v278, 4
    %v280 = vand.u32 %v278, 15
    %v281 = vsub.s32 0, %v280
    %v282 = vsel %vm276, %v281, %v280
    %vm283 = vcmp.lt.s32.totalorder %v267, 0
    %v284 = vsub.s32 0, %v267
    %v285 = vsel %vm283, %v284, %v267
    %v286 = vshrl.u32 %v285, 4
    %v287 = vand.u32 %v285, 15
    %v288 = vsub.s32 0, %v287
    %v289 = vsel %vm283, %v288, %v287
    %vm290 = vcmp.lt.s32.totalorder %v268, 0
    %v291 = vsub.s32 0, %v268
    %v292 = vsel %vm290, %v291, %v268
    %v293 = vshrl.u32 %v292, 4
    %v294 = vand.u32 %v292, 15
    %v295 = vsub.s32 0, %v294
    %v296 = vsel %vm290, %v295, %v294
    %vm297 = vcmp.ne.s32.totalorder %v275, 0
    %vm298 = vcmp.ne.s32.totalorder %v282, 0
    %vm299 = vcmp.ne.s32.totalorder %v289, 0
    %vm300 = vcmp.ne.s32.totalorder %v296, 0
    %vm301 = vcmp.lt.s32.totalorder %v275, 0
    %vm302 = vcmp.lt.s32.totalorder %v282, 0
    %vm303 = vcmp.lt.s32.totalorder %v289, 0
    %vm304 = vcmp.lt.s32.totalorder %v296, 0
    %vm305 = vmand %vm301, %vm297
    %vm306 = vmand %vm302, %vm298
    %vm307 = vmand %vm303, %vm299
    %vm308 = vmand %vm304, %vm300
    %v309 = vadd.s32 %v275, 16
    %v310 = vadd.s32 %v282, 16
    %v311 = vadd.s32 %v289, 16
    %v312 = vadd.s32 %v296, 16
    %v313 = vsel %vm305, %v309, %v275
    %v314 = vsel %vm306, %v310, %v282
    %v315 = vsel %vm307, %v311, %v289
    %v316 = vsel %vm308, %v312, %v296
    %vm317 = vcmp.gt.s32.totalorder %v313, 0
    %vm318 = vcmp.gt.s32.totalorder %v314, 0
    %vm319 = vcmp.gt.s32.totalorder %v315, 0
    %vm320 = vcmp.gt.s32.totalorder %v316, 0
    %v321 = vrot.slane %v260, 7
    %v322 = vrot.slane %v261, 7
    %v323 = vrot.slane %v262, 7
    %v324 = vrot.slane %v263, 7
    %vm325 = vcmp.lt.s32.totalorder %v265, 1
    %v326 = vsel %vm325, %v323, %v324
    %v327 = vsel %vm325, %v322, %v323
    %v328 = vsel %vm325, %v321, %v322
    %v329 = vsel %vm325, %v324, %v321
    %v330 = vsel %vm317, 1, 0
    %v331 = vsel %vm318, 1, 0
    %v332 = vsel %vm319, 1, 0
    %v333 = vsel %vm320, 1, 0
    %vm334 = vcmp.eq.s32.totalorder %v330, 1
    %vm335 = vcmp.eq.s32.totalorder %v331, 1
    %vm336 = vcmp.eq.s32.totalorder %v332, 1
    %vm337 = vcmp.eq.s32.totalorder %v333, 1
    %v338 = vsel %vm334, %v329, 0.0
    %v339 = vsel %vm335, %v328, 0.0
    %v340 = vsel %vm336, %v327, 0.0
    %v341 = vsel %vm337, %v326, 0.0
    %v342 = vpack.c.bf16 %v339, %v338
    %v343 = vpack.c.bf16 %v341, %v340
    %v344 = vld [vmem:[#allocation8] sm:$0xf]
    %v345 = vld [vmem:[#allocation8 + $0x4] sm:$0xf]
    %v346 = vld [vmem:[#allocation8 + $0x8] sm:$0xf]
    %v347 = vld [vmem:[#allocation8 + $0xc] sm:$0xf]
    %v348 = vld [vmem:[#allocation8 + $0x10] sm:$0xf]
    %v349 = vld [vmem:[#allocation8 + $0x14] sm:$0xf]
    %v350 = vld [vmem:[#allocation8 + $0x18] sm:$0xf]
    %v351 = vld [vmem:[#allocation8 + $0x1c] sm:$0xf]
    %v352 = vpack.c.bf16 %v261, %v260
    %v353 = vpack.c.bf16 %v263, %v262
    %v354 = vld [vmem:[#allocation10] sm:$0xf]
    %v355 = vld [vmem:[#allocation10 + $0x4] sm:$0xf]
    %v356 = vld [vmem:[#allocation10 + $0x8] sm:$0xf]
    %v357 = vld [vmem:[#allocation10 + $0xc] sm:$0xf]
    %v358 = vld [vmem:[#allocation10 + $0x10] sm:$0xf]
    %v359 = vld [vmem:[#allocation10 + $0x14] sm:$0xf]
    %v360 = vld [vmem:[#allocation10 + $0x18] sm:$0xf]
    %v361 = vld [vmem:[#allocation10 + $0x1c] sm:$0xf]
    %v370 = vunpack.c.l.b16 %v354
    %v371 = vunpack.c.l.b16 %v355
    %v372 = vunpack.c.l.b16 %v356
    %v373 = vunpack.c.l.b16 %v357
    %v374 = vunpack.c.l.b16 %v358
    %v375 = vunpack.c.l.b16 %v359
    %v376 = vunpack.c.l.b16 %v360
    %v377 = vunpack.c.l.b16 %v361
    %v378 = vpack.c.b16 %v371, %v370
    %v379 = vpack.c.b16 %v373, %v372
    %v380 = vpack.c.b16 %v375, %v374
    %v381 = vpack.c.b16 %v377, %v376
    %vm386 = vcmask 523264
    %v388 = vsel %vm386, %v352, 0
    %v391 = vsel %vm386, %v353, 0
    %393 = vmatprep.subr.bf16.mxu0 0
    %394 = vmatpush1.bf16.msra.mxu0 %v378
    %395 = vmatprep.subr.bf16.mxu0 0
    %396 = vmatpush1.bf16.msra.mxu0 %v379
    %397 = vmatprep.subr.bf16.mxu0 0
    %398 = vmatpush1.bf16.msra.mxu0 %v380
    %399 = vmatprep.subr.bf16.mxu0 0
    %400 = vmatpush1.bf16.msra.mxu0 %v381
    %401 = vmatprep.subr.bf16.mxu0 0
    %402 = vmatpush1.bf16.msra.mxu0 0
    %403 = vmatprep.subr.bf16.mxu0 0
    %404 = vmatpush1.bf16.msra.mxu0 0
    %405 = vmatprep.subr.bf16.mxu0 0
    %406 = vmatpush1.bf16.msra.mxu0 0
    %407 = vmatprep.subr.bf16.mxu0 0
    %408 = vmatpush1.bf16.msra.mxu0 0
    %409 = vmatprep.subr.bf16.mxu0 0
    %410 = vmatpush1.bf16.msra.mxu0 0
    %411 = vmatprep.subr.bf16.mxu0 0
    %412 = vmatpush1.bf16.msra.mxu0 0
    %413 = vmatprep.subr.bf16.mxu0 0
    %414 = vmatpush1.bf16.msra.mxu0 0
    %415 = vmatprep.subr.bf16.mxu0 0
    %416 = vmatpush1.bf16.msra.mxu0 0
    %417 = vmatprep.subr.bf16.mxu0 0
    %418 = vmatpush1.bf16.msra.mxu0 0
    %419 = vmatprep.subr.bf16.mxu0 0
    %420 = vmatpush1.bf16.msra.mxu0 0
    %421 = vmatprep.subr.bf16.mxu0 0
    %422 = vmatpush1.bf16.msra.mxu0 0
    %423 = vmatprep.subr.bf16.mxu0 0
    %424 = vmatpush1.bf16.msra.mxu0 0
    %425 = vmatprep.mubr.bf16.mxu0 0
    %426 = vmatmul.mubr.bf16.gmra.mrb[0].mxu0 %v388
    %v427 = vpop.f32.mrb[0].mxu0
    %v428 = vadd.f32 0.0, %v427
    %v429 = vpop.f32.mrb[0].mxu0
    %v430 = vpop.f32.mrb[0].mxu0
    %v431 = vadd.f32 0.0, %v430
    %v432 = vpop.f32.mrb[0].mxu0
    %433 = vmatprep.mubr.bf16.mxu0 0
    %434 = vmatmul.mubr.bf16.gmra.mrb[0].mxu0 %v391
    %v435 = vpop.f32.mrb[0].mxu0
    %v436 = vadd.f32 0.0, %v435
    %v437 = vpop.f32.mrb[0].mxu0
    %v438 = vpop.f32.mrb[0].mxu0
    %v439 = vadd.f32 0.0, %v438
    %v440 = vpop.f32.mrb[0].mxu0
    %441 = vdwg.mxu0
    %v450 = vunpack.c.l.b16 %v344
    %v451 = vunpack.c.l.b16 %v345
    %v452 = vunpack.c.l.b16 %v346
    %v453 = vunpack.c.l.b16 %v347
    %v454 = vunpack.c.l.b16 %v348
    %v455 = vunpack.c.l.b16 %v349
    %v456 = vunpack.c.l.b16 %v350
    %v457 = vunpack.c.l.b16 %v351
    %v458 = vpack.c.b16 %v451, %v450
    %v459 = vpack.c.b16 %v453, %v452
    %v460 = vpack.c.b16 %v455, %v454
    %v461 = vpack.c.b16 %v457, %v456
    %v467 = vsel %vm386, %v342, 0
    %v470 = vsel %vm386, %v343, 0
    %472 = vmatprep.subr.bf16.mxu0 0
    %473 = vmatpush1.bf16.msra.mxu0 %v458
    %474 = vmatprep.subr.bf16.mxu0 0
    %475 = vmatpush1.bf16.msra.mxu0 %v459
    %476 = vmatprep.subr.bf16.mxu0 0
    %477 = vmatpush1.bf16.msra.mxu0 %v460
    %478 = vmatprep.subr.bf16.mxu0 0
    %479 = vmatpush1.bf16.msra.mxu0 %v461
    %480 = vmatprep.subr.bf16.mxu0 0
    %481 = vmatpush1.bf16.msra.mxu0 0
    %482 = vmatprep.subr.bf16.mxu0 0
    %483 = vmatpush1.bf16.msra.mxu0 0
    %484 = vmatprep.subr.bf16.mxu0 0
    %485 = vmatpush1.bf16.msra.mxu0 0
    %486 = vmatprep.subr.bf16.mxu0 0
    %487 = vmatpush1.bf16.msra.mxu0 0
    %488 = vmatprep.subr.bf16.mxu0 0
    %489 = vmatpush1.bf16.msra.mxu0 0
    %490 = vmatprep.subr.bf16.mxu0 0
    %491 = vmatpush1.bf16.msra.mxu0 0
    %492 = vmatprep.subr.bf16.mxu0 0
    %493 = vmatpush1.bf16.msra.mxu0 0
    %494 = vmatprep.subr.bf16.mxu0 0
    %495 = vmatpush1.bf16.msra.mxu0 0
    %496 = vmatprep.subr.bf16.mxu0 0
    %497 = vmatpush1.bf16.msra.mxu0 0
    %498 = vmatprep.subr.bf16.mxu0 0
    %499 = vmatpush1.bf16.msra.mxu0 0
    %500 = vmatprep.subr.bf16.mxu0 0
    %501 = vmatpush1.bf16.msra.mxu0 0
    %502 = vmatprep.subr.bf16.mxu0 0
    %503 = vmatpush1.bf16.msra.mxu0 0
    %504 = vmatprep.mubr.bf16.mxu0 0
    %505 = vmatmul.mubr.bf16.gmra.mrb[0].mxu0 %v467
    %v506 = vpop.f32.mrb[0].mxu0
    %v507 = vadd.f32 %v428, %v506
    %v508 = vpop.f32.mrb[0].mxu0
    %v509 = vpop.f32.mrb[0].mxu0
    %v510 = vadd.f32 %v431, %v509
    %v511 = vpop.f32.mrb[0].mxu0
    %512 = vmatprep.mubr.bf16.mxu0 0
    %513 = vmatmul.mubr.bf16.gmra.mrb[0].mxu0 %v470
    %v514 = vpop.f32.mrb[0].mxu0
    %v515 = vadd.f32 %v436, %v514
    %v516 = vpop.f32.mrb[0].mxu0
    %v517 = vpop.f32.mrb[0].mxu0
    %v518 = vadd.f32 %v439, %v517
    %v519 = vpop.f32.mrb[0].mxu0
    %520 = vdwg.mxu0
    %v521 = vld [vmem:[#allocation11] sm:$0x1]
    %v523 = vlaneseq
    %v524 = vshrl.u32 %v523, 7
    %v525 = vsub.s32 0, %v524
    %v526 = vrot.slane %v521, %v525
    %v528 = vadd.f32 %v507, %v526
    %v529 = vadd.f32 %v510, %v526
    %v530 = vadd.f32 %v515, %v526
    %v531 = vadd.f32 %v518, %v526
    %v532 = vmax.f32 %v528, 0.0
    %v533 = vmax.f32 %v529, 0.0
    %v534 = vmax.f32 %v530, 0.0
    %v535 = vmax.f32 %v531, 0.0
    %v536 = vpack.c.bf16 %v533, %v532
    %v537 = vpack.c.bf16 %v535, %v534
    %v538 = vld [vmem:[#allocation13] sm:$0xf]
    %v539 = vld [vmem:[#allocation13 + $0x4] sm:$0xf]
    %v540 = vld [vmem:[#allocation13 + $0x8] sm:$0xf]
    %v541 = vld [vmem:[#allocation13 + $0xc] sm:$0xf]
    %v542 = vld [vmem:[#allocation13 + $0x10] sm:$0xf]
    %v543 = vld [vmem:[#allocation13 + $0x14] sm:$0xf]
    %v544 = vld [vmem:[#allocation13 + $0x18] sm:$0xf]
    %v545 = vld [vmem:[#allocation13 + $0x1c] sm:$0xf]
    %v546 = vld [vmem:[#allocation14] sm:$0x1]
    %v548 = vlaneseq
    %v549 = vshrl.u32 %v548, 7
    %v550 = vsub.s32 0, %v549
    %v551 = vrot.slane %v546, %v550
    %v561 = vunpack.c.l.b16 %v538
    %v562 = vunpack.c.l.b16 %v539
    %v563 = vunpack.c.l.b16 %v540
    %v564 = vunpack.c.l.b16 %v541
    %v565 = vunpack.c.l.b16 %v542
    %v566 = vunpack.c.l.b16 %v543
    %v567 = vunpack.c.l.b16 %v544
    %v568 = vunpack.c.l.b16 %v545
    %v569 = vpack.c.b16 %v562, %v561
    %v570 = vpack.c.b16 %v564, %v563
    %v571 = vpack.c.b16 %v566, %v565
    %v572 = vpack.c.b16 %v568, %v567
    %v578 = vsel %vm386, %v536, 0
    %v581 = vsel %vm386, %v537, 0
    %583 = vmatprep.subr.bf16.mxu0 0
    %584 = vmatpush1.bf16.msra.mxu0 %v569
    %585 = vmatprep.subr.bf16.mxu0 0
    %586 = vmatpush1.bf16.msra.mxu0 %v570
    %587 = vmatprep.subr.bf16.mxu0 0
    %588 = vmatpush1.bf16.msra.mxu0 %v571
    %589 = vmatprep.subr.bf16.mxu0 0
    %590 = vmatpush1.bf16.msra.mxu0 %v572
    %591 = vmatprep.subr.bf16.mxu0 0
    %592 = vmatpush1.bf16.msra.mxu0 0
    %593 = vmatprep.subr.bf16.mxu0 0
    %594 = vmatpush1.bf16.msra.mxu0 0
    %595 = vmatprep.subr.bf16.mxu0 0
    %596 = vmatpush1.bf16.msra.mxu0 0
    %597 = vmatprep.subr.bf16.mxu0 0
    %598 = vmatpush1.bf16.msra.mxu0 0
    %599 = vmatprep.subr.bf16.mxu0 0
    %600 = vmatpush1.bf16.msra.mxu0 0
    %601 = vmatprep.subr.bf16.mxu0 0
    %602 = vmatpush1.bf16.msra.mxu0 0
    %603 = vmatprep.subr.bf16.mxu0 0
    %604 = vmatpush1.bf16.msra.mxu0 0
    %605 = vmatprep.subr.bf16.mxu0 0
    %606 = vmatpush1.bf16.msra.mxu0 0
    %607 = vmatprep.subr.bf16.mxu0 0
    %608 = vmatpush1.bf16.msra.mxu0 0
    %609 = vmatprep.subr.bf16.mxu0 0
    %610 = vmatpush1.bf16.msra.mxu0 0
    %611 = vmatprep.subr.bf16.mxu0 0
    %612 = vmatpush1.bf16.msra.mxu0 0
    %613 = vmatprep.subr.bf16.mxu0 0
    %614 = vmatpush1.bf16.msra.mxu0 0
    %615 = vmatprep.mubr.bf16.mxu0 0
    %616 = vmatmul.mubr.bf16.gmra.mrb[0].mxu0 %v578
    %v617 = vpop.f32.mrb[0].mxu0
    %v618 = vadd.f32 %v551, %v617
    %v619 = vpop.f32.mrb[0].mxu0
    %v620 = vpop.f32.mrb[0].mxu0
    %v621 = vadd.f32 %v551, %v620
    %v622 = vpop.f32.mrb[0].mxu0
    %623 = vmatprep.mubr.bf16.mxu0 0
    %624 = vmatmul.mubr.bf16.gmra.mrb[0].mxu0 %v581
    %v625 = vpop.f32.mrb[0].mxu0
    %v626 = vadd.f32 %v551, %v625
    %v627 = vpop.f32.mrb[0].mxu0
    %v628 = vpop.f32.mrb[0].mxu0
    %v629 = vadd.f32 %v551, %v628
    %v630 = vpop.f32.mrb[0].mxu0
    %631 = vdwg.mxu0
    %v632 = vmax.f32 %v618, 0.0
    %v633 = vmax.f32 %v621, 0.0
    %v634 = vmax.f32 %v626, 0.0
    %v635 = vmax.f32 %v629, 0.0
    %v636 = vadd.f32 %v134, %v632
    %v637 = vadd.f32 %v135, %v633
    %v638 = vadd.f32 %v136, %v634
    %v639 = vadd.f32 %v137, %v635
    %640 = vst [vmem:[#allocation16] sm:$0xff] %v636
    %641 = vst [vmem:[#allocation16 + $0x8] sm:$0xff] %v637
    %642 = vst [vmem:[#allocation16 + $0x10] sm:$0xff] %v638
    %643 = vst [vmem:[#allocation16 + $0x18] sm:$0xff] %v639
    // Predicated region
    $region66: #{masked_residual_block.1} parent=1 // pred_check
      _
    $region67: #{masked_residual_block.1} parent=1 // pred_check_branch
      %645 = sbr.rel (0) target = $region69
    $region68: #{masked_residual_block.1} parent=1 // pred_region
      %s647 = ssub.s32 512, 512
      %648 = vsyncadd [#allocation4], %s647
      %s649 = sshll.u32 [#allocation16], 4
      %s650 = int_to_ptr.vmem [resolvable:$true] %s649
      %655 = dma.vmem_to_hbm [thread:$0]  %s650, 512, %s8, [#allocation4], 128, 128, 8
    $region69: #{masked_residual_block.1} parent=1 // pred_fallthru
      _
    // Predicated region
    $region70: #{masked_residual_block.1} parent=1 // pred_check
      _
    $region71: #{masked_residual_block.1} parent=1 // pred_check_branch
      %657 = sbr.rel (0) target = $region73
    $region72: #{masked_residual_block.1} parent=1 // pred_region
      %658 = dma.done [#allocation4], 512
    $region73: #{masked_residual_block.1} parent=1 // pred_fallthru
      _
    %659 = vsyncpa [#allocation3], 1
    %660 = vsyncpa [#allocation6], 1
    %661 = vsyncpa [#allocation9], 1
    %662 = vsyncpa [#allocation12], 1
    %663 = vsyncpa [#allocation15], 1
    %664 = vsyncpa [#allocation4], 1

</llo_original>
